<compile_context>
chip_gen: v5e
topology: v5e:2x2
jax: 0.10.0
libtpu: 0.0.40
codegen_flags: <defaults>
</compile_context>

<pallas_src>
import jax
import jax.numpy as jnp
from jax import lax
from jax.experimental import pallas as pl
from jax.experimental.pallas import tpu as pltpu

EMBEDDING_DIM = 100
HIDDEN_SIZE = 64
NUM_LAYERS = 2          # hard-coded as two stacked recurrences below
NUM_CLASSES = 2

# MXU / vreg friendly padded sizes
EP = 128                # embedding dim 100 -> 128
HP = 128                # hidden size   64 -> 128
CP = 128                # num classes    2 -> 128 (padded lanes masked)
NEG_INF = jnp.float32(-1e30)


def input_proj_kernel(x_ref, w_ref, b_ref, o_ref):
    """One big parallel matmul: proj[t] = emb[t] @ W_ih0 + (b_ih0 + b_hh0).

    x_ref: (TC, Bp, EP)  time-chunk of padded embeddings
    w_ref: (EP, HP)      padded W_ih_l0^T
    b_ref: (1, HP)       folded/padded layer-0 bias
    o_ref: (TC, Bp, HP)
    """
    tc, bp, ep = x_ref.shape
    hp = o_ref.shape[-1]
    x = x_ref[...].reshape(tc * bp, ep)
    y = jnp.dot(x, w_ref[...], preferred_element_type=jnp.float32) + b_ref[...]
    o_ref[...] = y.reshape(tc, bp, hp)


def rnn_recurrence_kernel(proj_ref, whh0_ref, wih1_ref, whh1_ref, b1_ref,
                          wfc_ref, bfc_ref, out_ref, h0_ref, h1_ref):
    """Serial 2-layer tanh RNN recurrence over one chunk of TC timesteps.

    proj_ref: (TC, Bp, HP)  precomputed layer-0 input projection (bias folded)
    whh0_ref: (HP, HP)      padded W_hh_l0^T
    wih1_ref: (HP, HP)      padded W_ih_l1^T
    whh1_ref: (HP, HP)      padded W_hh_l1^T
    b1_ref:   (Bp, HP)      pre-broadcast folded layer-1 bias
    wfc_ref:  (HP, CP)      padded W_fc^T
    bfc_ref:  (Bp, CP)      pre-broadcast FC bias, padded class lanes = -1e30
    out_ref:  (Bp, CP)      softmax probabilities (padded), written at last step
    h0_ref/h1_ref: (Bp, HP) persistent hidden-state scratch
    """
    t = pl.program_id(0)

    @pl.when(t == 0)
    def _():
        # hidden=None in the PyTorch forward -> zero initial hidden states
        h0_ref[...] = jnp.zeros_like(h0_ref)
        h1_ref[...] = jnp.zeros_like(h1_ref)

    tc = proj_ref.shape[0]
    whh0 = whh0_ref[...]
    wih1 = wih1_ref[...]
    whh1 = whh1_ref[...]
    b1 = b1_ref[...]

    h0 = h0_ref[...]
    h1 = h1_ref[...]
    # Statically unrolled chunk: exposes the two layer dependency chains
    # (layer1(t) can overlap layer0(t+1)) to the scheduler. Two separate dots
    # per layer-1 step avoid a per-step lane-axis concat copy.
    for i in range(tc):
        pre0 = proj_ref[i] + jnp.dot(h0, whh0,
                                     preferred_element_type=jnp.float32)
        h0 = jnp.tanh(pre0)
        pre1 = (jnp.dot(h0, wih1, preferred_element_type=jnp.float32)
                + jnp.dot(h1, whh1, preferred_element_type=jnp.float32)
                + b1)
        h1 = jnp.tanh(pre1)
    h0_ref[...] = h0
    h1_ref[...] = h1

    @pl.when(t == pl.num_programs(0) - 1)
    def _():
        # last_hidden = rnn_out[:, -1, :] -> top-layer hidden at final timestep
        logits = (jnp.dot(h1, wfc_ref[...], preferred_element_type=jnp.float32)
                  + bfc_ref[...])                           # (Bp, CP)
        m = jnp.max(logits, axis=-1, keepdims=True)
        e = jnp.exp(logits - m)                             # padded lanes -> 0
        out_ref[...] = e / jnp.sum(e, axis=-1, keepdims=True)


def _pick_chunk(T, max_chunk=16):
    """Largest divisor of T that is <= max_chunk (static unroll factor)."""
    for c in range(min(T, max_chunk), 0, -1):
        if T % c == 0:
            return c
    return 1


def method_rnn_forward(x_tokens, params):
    """Classification forward pass of Method_RNN using the Pallas kernels."""
    B, T = x_tokens.shape
    E, H, C = EMBEDDING_DIM, HIDDEN_SIZE, NUM_CLASSES
    Bp = ((B + 7) // 8) * 8
    TC = _pick_chunk(T)
    f32 = jnp.float32

    # --- glue: embedding gather straight into padded, time-major layout ------
    # pad the lane dim of the (small) table once and the (tiny) token matrix
    # on the batch dim; the gather then directly yields (T, Bp, EP).
    emb_table = jnp.pad(params["embedding"].astype(f32), ((0, 0), (0, EP - E)))
    tokens_tm = jnp.pad(x_tokens, ((0, Bp - B), (0, 0))).T                # (T,Bp)
    emb = jnp.take(emb_table, tokens_tm, axis=0)                          # (T,Bp,EP)

    # --- weight prep: pre-transpose, pad, fold / broadcast biases ------------
    wih0 = jnp.pad(params["w_ih_l0"].T.astype(f32), ((0, EP - E), (0, HP - H)))
    b0 = jnp.pad((params["b_ih_l0"] + params["b_hh_l0"]).astype(f32),
                 (0, HP - H)).reshape(1, HP)
    whh0 = jnp.pad(params["w_hh_l0"].T.astype(f32), ((0, HP - H), (0, HP - H)))
    wih1 = jnp.pad(params["w_ih_l1"].T.astype(f32), ((0, HP - H), (0, HP - H)))
    whh1 = jnp.pad(params["w_hh_l1"].T.astype(f32), ((0, HP - H), (0, HP - H)))
    b1 = jnp.broadcast_to(
        jnp.pad((params["b_ih_l1"] + params["b_hh_l1"]).astype(f32), (0, HP - H)),
        (Bp, HP))
    wfc = jnp.pad(params["w_fc"].T.astype(f32), ((0, HP - H), (0, CP - C)))
    bfc_row = jnp.full((CP,), NEG_INF, f32).at[:C].set(params["b_fc"].astype(f32))
    bfc = jnp.broadcast_to(bfc_row, (Bp, CP))

    grid = (T // TC,)

    # --- stage 1: fully-parallel layer-0 input projection (big MXU matmul) ---
    proj = pl.pallas_call(
        input_proj_kernel,
        out_shape=jax.ShapeDtypeStruct((T, Bp, HP), f32),
        grid=grid,
        in_specs=[
            pl.BlockSpec((TC, Bp, EP), lambda t: (t, 0, 0)),
            pl.BlockSpec((EP, HP), lambda t: (0, 0)),
            pl.BlockSpec((1, HP), lambda t: (0, 0)),
        ],
        out_specs=pl.BlockSpec((TC, Bp, HP), lambda t: (t, 0, 0)),
        compiler_params=pltpu.CompilerParams(
            dimension_semantics=("parallel",)),
    )(emb, wih0, b0)

    # --- stage 2: serial recurrence, streamed T-chunk grid, fused matmuls ----
    out_pad = pl.pallas_call(
        rnn_recurrence_kernel,
        out_shape=jax.ShapeDtypeStruct((Bp, CP), f32),
        grid=grid,
        in_specs=[
            pl.BlockSpec((TC, Bp, HP), lambda t: (t, 0, 0)),
            pl.BlockSpec((HP, HP), lambda t: (0, 0)),
            pl.BlockSpec((HP, HP), lambda t: (0, 0)),
            pl.BlockSpec((HP, HP), lambda t: (0, 0)),
            pl.BlockSpec((Bp, HP), lambda t: (0, 0)),
            pl.BlockSpec((HP, CP), lambda t: (0, 0)),
            pl.BlockSpec((Bp, CP), lambda t: (0, 0)),
        ],
        out_specs=pl.BlockSpec((Bp, CP), lambda t: (0, 0)),
        scratch_shapes=[
            pltpu.VMEM((Bp, HP), f32),   # layer-0 hidden state
            pltpu.VMEM((Bp, HP), f32),   # layer-1 hidden state
        ],
        compiler_params=pltpu.CompilerParams(
            dimension_semantics=("arbitrary",)),
    )(proj, whh0, wih1, whh1, b1, wfc, bfc)

    return out_pad[:B, :C]


def reference_forward(x_tokens, params):
    """Pure-JAX reference mirroring torch.nn.RNN(num_layers=2) + Linear + Softmax."""
    embedded = jnp.take(params["embedding"], x_tokens, axis=0)    # (B, T, E)
    B = embedded.shape[0]
    h0 = jnp.zeros((B, HIDDEN_SIZE), jnp.float32)
    h1 = jnp.zeros((B, HIDDEN_SIZE), jnp.float32)

    def step(carry, x_t):
        h0, h1 = carry
        h0 = jnp.tanh(x_t @ params["w_ih_l0"].T + params["b_ih_l0"]
                      + h0 @ params["w_hh_l0"].T + params["b_hh_l0"])
        h1 = jnp.tanh(h0 @ params["w_ih_l1"].T + params["b_ih_l1"]
                      + h1 @ params["w_hh_l1"].T + params["b_hh_l1"])
        return (h0, h1), None

    (h0, h1), _ = lax.scan(step, (h0, h1),
                           jnp.transpose(embedded, (1, 0, 2)).astype(jnp.float32))
    logits = h1 @ params["w_fc"].T + params["b_fc"]
    return jax.nn.softmax(logits, axis=1)


def init_params(key, vocab_size):
    """Deterministic parameter init matching the PyTorch module's shapes."""
    ks = jax.random.split(key, 11)
    kH = 1.0 / jnp.sqrt(HIDDEN_SIZE)

    def u(k, shape, bound):
        return jax.random.uniform(k, shape, jnp.float32, -bound, bound)

    return {
        # nn.Embedding(vocab_size, 100): N(0, 1)
        "embedding": jax.random.normal(ks[0], (vocab_size, EMBEDDING_DIM),
                                       jnp.float32),
        # nn.RNN(100, 64, num_layers=2, tanh): U(-1/sqrt(H), 1/sqrt(H))
        "w_ih_l0": u(ks[1], (HIDDEN_SIZE, EMBEDDING_DIM), kH),
        "w_hh_l0": u(ks[2], (HIDDEN_SIZE, HIDDEN_SIZE), kH),
        "b_ih_l0": u(ks[3], (HIDDEN_SIZE,), kH),
        "b_hh_l0": u(ks[4], (HIDDEN_SIZE,), kH),
        "w_ih_l1": u(ks[5], (HIDDEN_SIZE, HIDDEN_SIZE), kH),
        "w_hh_l1": u(ks[6], (HIDDEN_SIZE, HIDDEN_SIZE), kH),
        "b_ih_l1": u(ks[7], (HIDDEN_SIZE,), kH),
        "b_hh_l1": u(ks[8], (HIDDEN_SIZE,), kH),
        # nn.Linear(64, 2): U(-1/sqrt(64), 1/sqrt(64))
        "w_fc": u(ks[9], (NUM_CLASSES, HIDDEN_SIZE), kH),
        "b_fc": u(ks[10], (NUM_CLASSES,), kH),
    }


if __name__ == "__main__":
    key = jax.random.PRNGKey(0)
    k_params, k_tokens = jax.random.split(key)

    vocab_size = 50        # small synthetic vocab (module builds it from text)
    batch = 2
    seq_len = 8            # small stand-in for max_sequence_length=200

    params = init_params(k_params, vocab_size)
    x = jax.random.randint(k_tokens, (batch, seq_len), 0, vocab_size,
                           dtype=jnp.int32)

    y_pred = method_rnn_forward(x, params)
    jax.block_until_ready(y_pred)

    y_ref = reference_forward(x, params)
    assert y_pred.shape == (batch, NUM_CLASSES)
    assert jnp.allclose(y_pred, y_ref, atol=1e-4, rtol=1e-4), \
        f"mismatch: {y_pred} vs {y_ref}"
    assert jnp.allclose(jnp.sum(y_pred, axis=1), 1.0, atol=1e-5)

    print("KERNEL_OK")
</pallas_src>

<mosaic_0001>
module attributes {stable_mosaic.version = 11 : i64} {
  func.func @input_proj_kernel(%arg0: i32, %arg1: memref<8x8x128xf32, #tpu.memory_space<vmem>>, %arg2: memref<128x128xf32, #tpu.memory_space<vmem>>, %arg3: memref<1x128xf32, #tpu.memory_space<vmem>>, %arg4: memref<8x8x128xf32, #tpu.memory_space<vmem>>) attributes {dimension_semantics = [#tpu.dimension_semantics<parallel>], iteration_bounds = array<i64: 1>, scalar_prefetch = 0 : i64, scratch_operands = 0 : i64, tpu.core_type = #tpu.core_type<tc>, window_params = [{transform_indices = @transform_0, window_bounds = array<i64: 8, 8, 128>}, {pipeline_mode = #tpu.pipeline_mode<synchronous>, transform_indices = @transform_1, window_bounds = array<i64: 128, 128>}, {pipeline_mode = #tpu.pipeline_mode<synchronous>, transform_indices = @transform_2, window_bounds = array<i64: 1, 128>}, {transform_indices = @transform_3, window_bounds = array<i64: 8, 8, 128>}]} {
    %c0 = arith.constant 0 : index
    %c0_0 = arith.constant 0 : index
    %c0_1 = arith.constant 0 : index
    %0 = vector.load %arg1[%c0, %c0_0, %c0_1] : memref<8x8x128xf32, #tpu.memory_space<vmem>>, vector<8x8x128xf32>
    %1 = vector.shape_cast %0 : vector<8x8x128xf32> to vector<64x128xf32>
    %c0_2 = arith.constant 0 : index
    %c0_3 = arith.constant 0 : index
    %2 = vector.load %arg2[%c0_2, %c0_3] : memref<128x128xf32, #tpu.memory_space<vmem>>, vector<128x128xf32>
    %cst = arith.constant dense<0.000000e+00> : vector<64x128xf32>
    %3 = tpu.matmul %1, %2, %cst {dimension_numbers = #tpu.dot_dimension_numbers<[1], [0], [0], [1], [0, 0, 1, 1], [], []>} : vector<64x128xf32>, vector<128x128xf32>, vector<64x128xf32> -> vector<64x128xf32>
    %c0_4 = arith.constant 0 : index
    %c0_5 = arith.constant 0 : index
    %4 = vector.load %arg3[%c0_4, %c0_5] : memref<1x128xf32, #tpu.memory_space<vmem>>, vector<1x128xf32>
    %5 = vector.broadcast %4 : vector<1x128xf32> to vector<64x128xf32>
    %6 = arith.addf %3, %5 : vector<64x128xf32>
    %7 = vector.shape_cast %6 : vector<64x128xf32> to vector<8x8x128xf32>
    %c0_6 = arith.constant 0 : index
    %c0_7 = arith.constant 0 : index
    %c0_8 = arith.constant 0 : index
    %8 = vector.load %arg4[%c0_6, %c0_7, %c0_8] : memref<8x8x128xf32, #tpu.memory_space<vmem>>, vector<8x8x128xf32>
    tpu.vector_store %arg4[%c0_6, %c0_7, %c0_8], %7 {strides = array<i32>} : memref<8x8x128xf32, #tpu.memory_space<vmem>>, vector<8x8x128xf32>,
    return
  }
  func.func @transform_0(%arg0: i32) -> (i32, i32, i32) {
    %c0_i32 = arith.constant 0 : i32
    %c0_i32_0 = arith.constant 0 : i32
    %c0_i32_1 = arith.constant 0 : i32
    return %arg0, %c0_i32, %c0_i32_0 : i32, i32, i32
  }
  func.func @transform_1(%arg0: i32) -> (i32, i32) {
    %c0_i32 = arith.constant 0 : i32
    %c0_i32_0 = arith.constant 0 : i32
    %c0_i32_1 = arith.constant 0 : i32
    return %c0_i32, %c0_i32_0 : i32, i32
  }
  func.func @transform_2(%arg0: i32) -> (i32, i32) {
    %c0_i32 = arith.constant 0 : i32
    %c0_i32_0 = arith.constant 0 : i32
    %c0_i32_1 = arith.constant 0 : i32
    return %c0_i32, %c0_i32_0 : i32, i32
  }
  func.func @transform_3(%arg0: i32) -> (i32, i32, i32) {
    %c0_i32 = arith.constant 0 : i32
    %c0_i32_0 = arith.constant 0 : i32
    %c0_i32_1 = arith.constant 0 : i32
    return %arg0, %c0_i32, %c0_i32_0 : i32, i32, i32
  }
}

</mosaic_0001>

<llo_original>
// kernel: tpu_custom_call.1
$region0: #{tpu_custom_call.1}
  #allocation0 [shape = 'u32[]', space=smem, size = 0x4, offset = 0x4, fixed_abs, tag = 'smem constant byte address 0x4 - core index']
  #allocation1 [shape = 'u32[72,128]{1,0:T(1,128)}', space=vmem, size = 0x9000, scoped, tag = 'internal scratch']
  %s0 = inlined_call_operand.hbm [shape: f32[8,8,128], index: 0, kind: input, shape index: {}]
  %s1 = inlined_call_operand.hbm [shape: f32[128,128], index: 1, kind: input, shape index: {}]
  %s2 = inlined_call_operand.vmem [shape: f32[1,128], index: 2, kind: input, shape index: {}]
  %s3 = inlined_call_operand.hbm [shape: f32[8,8,128], index: 3, kind: output, shape index: {}]
  %s4 = sld [smem:[#allocation0]]
  $region30: #{tpu_custom_call.1} parent=0
    _
  %s6 = ssub.s32 1, %s4
  %s7 = scalar_select 0, %s6, %s4
  $region1: #{tpu_custom_call.1} parent=0
    #allocation2 [shape = 'u8[32768]{0}', space=vmem, size = 0x8000, scoped, tag = 'input window, operand 0, single buffered']
    #allocation3 [shape = 's32[1]{0}', space=sflag, size = 0x4, scoped, tag = 'scoped memory for tpu_custom_call.1']
    #allocation4 [shape = 's32[1]{0}', space=sflag, size = 0x4, scoped, tag = 'scoped memory for tpu_custom_call.1']
    #allocation5 [shape = 'u8[65536]{0}', space=vmem, size = 0x10000, scoped, tag = 'input window, operand 1, single buffered']
    #allocation6 [shape = 's32[1]{0}', space=sflag, size = 0x4, scoped, tag = 'scoped memory for tpu_custom_call.1']
    #allocation7 [shape = 'u8[32768]{0}', space=vmem, size = 0x8000, scoped, tag = 'output window, operand 0, single buffered']
    %8 = vsyncpa [#allocation3], 0
    %9 = vsyncpa [#allocation6], 0
    %10 = vsyncpa [#allocation4], 0
    // Predicated region
    $region2: #{tpu_custom_call.1} parent=1 // pred_check
      _
    $region3: #{tpu_custom_call.1} parent=1 // pred_check_branch
      %12 = sbr.rel (0) target = $region5
    $region4: #{tpu_custom_call.1} parent=1 // pred_region
      %14 = vsyncadd [#allocation3], 0
      %s15 = sshll.u32 %s0, 4
      %s16 = int_to_ptr.hbm [resolvable:$true] %s15
      %s17 = sshll.u32 [#allocation2], 4
      %s18 = int_to_ptr.vmem [resolvable:$true] %s17
      %23 = dma.hbm_to_vmem [thread:$0]  %s16, 1024, %s18, [#allocation3], 128, 128, 8
    $region5: #{tpu_custom_call.1} parent=1 // pred_fallthru
      _
    // Predicated region
    $region6: #{tpu_custom_call.1} parent=1 // pred_check
      _
    $region7: #{tpu_custom_call.1} parent=1 // pred_check_branch
      %25 = sbr.rel (0) target = $region9
    $region8: #{tpu_custom_call.1} parent=1 // pred_region
      %27 = vsyncadd [#allocation6], 0
      %s28 = sshll.u32 %s1, 4
      %s29 = int_to_ptr.hbm [resolvable:$true] %s28
      %s30 = sshll.u32 [#allocation5], 4
      %s31 = int_to_ptr.vmem [resolvable:$true] %s30
      %36 = dma.hbm_to_vmem [thread:$0]  %s29, 2048, %s31, [#allocation6], 128, 128, 8
    $region9: #{tpu_custom_call.1} parent=1 // pred_fallthru
      _
    // Predicated region
    $region10: #{tpu_custom_call.1} parent=1 // pred_check
      _
    $region11: #{tpu_custom_call.1} parent=1 // pred_check_branch
      %38 = sbr.rel (0) target = $region13
    $region12: #{tpu_custom_call.1} parent=1 // pred_region
      _
    $region13: #{tpu_custom_call.1} parent=1 // pred_fallthru
      _
    // Predicated region
    $region14: #{tpu_custom_call.1} parent=1 // pred_check
      _
    $region15: #{tpu_custom_call.1} parent=1 // pred_check_branch
      %40 = sbr.rel (0) target = $region17
    $region16: #{tpu_custom_call.1} parent=1 // pred_region
      %42 = dma.done [#allocation3], 1024
    $region17: #{tpu_custom_call.1} parent=1 // pred_fallthru
      _
    // Predicated region
    $region18: #{tpu_custom_call.1} parent=1 // pred_check
      _
    $region19: #{tpu_custom_call.1} parent=1 // pred_check_branch
      %44 = sbr.rel (0) target = $region21
    $region20: #{tpu_custom_call.1} parent=1 // pred_region
      %46 = dma.done [#allocation6], 2048
    $region21: #{tpu_custom_call.1} parent=1 // pred_fallthru
      _
    %v47 = vld [vmem:[#allocation2] sm:$0xff]
    %v48 = vld [vmem:[#allocation2 + $0x8] sm:$0xff]
    %v49 = vld [vmem:[#allocation2 + $0x10] sm:$0xff]
    %v50 = vld [vmem:[#allocation2 + $0x18] sm:$0xff]
    %v51 = vld [vmem:[#allocation2 + $0x20] sm:$0xff]
    %v52 = vld [vmem:[#allocation2 + $0x28] sm:$0xff]
    %v53 = vld [vmem:[#allocation2 + $0x30] sm:$0xff]
    %v54 = vld [vmem:[#allocation2 + $0x38] sm:$0xff]
    %v55 = vld [vmem:[#allocation5] sm:$0xff]
    %v56 = vld [vmem:[#allocation5 + $0x8] sm:$0xff]
    %v57 = vld [vmem:[#allocation5 + $0x10] sm:$0xff]
    %v58 = vld [vmem:[#allocation5 + $0x18] sm:$0xff]
    %v59 = vld [vmem:[#allocation5 + $0x20] sm:$0xff]
    %v60 = vld [vmem:[#allocation5 + $0x28] sm:$0xff]
    %v61 = vld [vmem:[#allocation5 + $0x30] sm:$0xff]
    %v62 = vld [vmem:[#allocation5 + $0x38] sm:$0xff]
    %v63 = vld [vmem:[#allocation5 + $0x40] sm:$0xff]
    %v64 = vld [vmem:[#allocation5 + $0x48] sm:$0xff]
    %v65 = vld [vmem:[#allocation5 + $0x50] sm:$0xff]
    %v66 = vld [vmem:[#allocation5 + $0x58] sm:$0xff]
    %v67 = vld [vmem:[#allocation5 + $0x60] sm:$0xff]
    %v68 = vld [vmem:[#allocation5 + $0x68] sm:$0xff]
    %v69 = vld [vmem:[#allocation5 + $0x70] sm:$0xff]
    %v70 = vld [vmem:[#allocation5 + $0x78] sm:$0xff]
    %v71 = vld [vmem:[%s2] sm:$0x1]
    %v73 = vperm.slane %v71, 0
    %75 = vmatpush.msra.mxu0 %v70
    %76 = vmatpush.msra.mxu0 %v69
    %77 = vmatpush.msra.mxu0 %v68
    %78 = vmatpush.msra.mxu0 %v67
    %79 = vmatpush.msra.mxu0 %v66
    %80 = vmatpush.msra.mxu0 %v65
    %81 = vmatpush.msra.mxu0 %v64
    %82 = vmatpush.msra.mxu0 %v63
    %83 = vmatpush.msra.mxu0 %v62
    %84 = vmatpush.msra.mxu0 %v61
    %85 = vmatpush.msra.mxu0 %v60
    %86 = vmatpush.msra.mxu0 %v59
    %87 = vmatpush.msra.mxu0 %v58
    %88 = vmatpush.msra.mxu0 %v57
    %89 = vmatpush.msra.mxu0 %v56
    %90 = vmatpush.msra.mxu0 %v55
    %91 = vmatmul.f32.gmra.mxu0 %v47
    %v92 = vpop.f32.mrf.mxu0
    %v93 = vadd.f32 %v73, %v92
    %94 = vmatmul.f32.gmra.mxu0 %v48
    %v95 = vpop.f32.mrf.mxu0
    %v96 = vadd.f32 %v73, %v95
    %97 = vmatmul.f32.gmra.mxu0 %v49
    %v98 = vpop.f32.mrf.mxu0
    %v99 = vadd.f32 %v73, %v98
    %100 = vmatmul.f32.gmra.mxu0 %v50
    %v101 = vpop.f32.mrf.mxu0
    %v102 = vadd.f32 %v73, %v101
    %103 = vmatmul.f32.gmra.mxu0 %v51
    %v104 = vpop.f32.mrf.mxu0
    %v105 = vadd.f32 %v73, %v104
    %106 = vmatmul.f32.gmra.mxu0 %v52
    %v107 = vpop.f32.mrf.mxu0
    %v108 = vadd.f32 %v73, %v107
    %109 = vmatmul.f32.gmra.mxu0 %v53
    %v110 = vpop.f32.mrf.mxu0
    %v111 = vadd.f32 %v73, %v110
    %112 = vmatmul.f32.gmra.mxu0 %v54
    %v113 = vpop.f32.mrf.mxu0
    %v114 = vadd.f32 %v73, %v113
    %115 = vdwg.mxu0
    %116 = vst [vmem:[#allocation7] sm:$0xff] %v93
    %117 = vst [vmem:[#allocation7 + $0x8] sm:$0xff] %v96
    %118 = vst [vmem:[#allocation7 + $0x10] sm:$0xff] %v99
    %119 = vst [vmem:[#allocation7 + $0x18] sm:$0xff] %v102
    %120 = vst [vmem:[#allocation7 + $0x20] sm:$0xff] %v105
    %121 = vst [vmem:[#allocation7 + $0x28] sm:$0xff] %v108
    %122 = vst [vmem:[#allocation7 + $0x30] sm:$0xff] %v111
    %123 = vst [vmem:[#allocation7 + $0x38] sm:$0xff] %v114
    // Predicated region
    $region22: #{tpu_custom_call.1} parent=1 // pred_check
      _
    $region23: #{tpu_custom_call.1} parent=1 // pred_check_branch
      %125 = sbr.rel (0) target = $region25
    $region24: #{tpu_custom_call.1} parent=1 // pred_region
      %127 = vsyncadd [#allocation4], 0
      %s128 = sshll.u32 [#allocation7], 4
      %s129 = int_to_ptr.vmem [resolvable:$true] %s128
      %s130 = sshll.u32 %s3, 4
      %s131 = int_to_ptr.hbm [resolvable:$true] %s130
      %136 = dma.vmem_to_hbm [thread:$0]  %s129, 1024, %s131, [#allocation4], 128, 128, 8
    $region25: #{tpu_custom_call.1} parent=1 // pred_fallthru
      _
    // Predicated region
    $region26: #{tpu_custom_call.1} parent=1 // pred_check
      _
    $region27: #{tpu_custom_call.1} parent=1 // pred_check_branch
      %138 = sbr.rel (0) target = $region29
    $region28: #{tpu_custom_call.1} parent=1 // pred_region
      %140 = dma.done [#allocation4], 1024
    $region29: #{tpu_custom_call.1} parent=1 // pred_fallthru
      _
    %141 = vsyncpa [#allocation3], 1
    %142 = vsyncpa [#allocation6], 1
    %143 = vsyncpa [#allocation4], 1

</llo_original>
